<compile_context>
chip_gen: v7x
topology: tpu7x:2x2x1
jax: 0.10.0
libtpu: 0.0.40
codegen_flags: <defaults>
</compile_context>

<pallas_src>
import functools

import numpy as np

import jax
import jax.numpy as jnp
from jax import lax
from jax.experimental import pallas as pl
from jax.experimental.pallas import tpu as pltpu


def _round_up(x, m):
    return (x + m - 1) // m * m


def _device_info():
    """(is_v7, vmem_capacity_bytes) with safe fallbacks."""
    try:
        kind = jax.devices()[0].device_kind.lower()
    except Exception:
        kind = ""
    is_v7 = "v7" in kind
    try:
        cap = int(pltpu.get_tpu_info().vmem_capacity_bytes)
    except Exception:
        cap = (64 if is_v7 else 128) * 1024 * 1024
    return is_v7, cap


def _vmem_estimate(nb, *, cin_p, cmid_p, cout, HW, cd, od, patch_rows):
    """Per-grid-step VMEM working set, including in-kernel intermediates."""
    b = 0
    b += 2 * nb * cin_p * HW * cd              # double-buffered input block
    b += 2 * nb * cout * HW * od               # double-buffered output block
    b += patch_rows * HW * cd                  # persistent im2col scratch
    b += cmid_p * HW * (4 + cd)                # conv1 f32 acc + compute-dtype h1
    b += cout * HW * 4                         # conv2 f32 acc
    b += 2 * max(cin_p, cmid_p) * HW * cd      # rolled / masked tap temporaries
    b += (cmid_p * 9 * cin_p + cout * 9 * cmid_p) * cd   # folded weights
    b += 2 * HW * 4                            # row/col iota input
    return b


def _double_conv_kernel(rowcol_ref, x_ref, w1_ref, b1_ref, w2_ref, b2_ref,
                        o_ref, *scratch, H, W, use_act, compute_dtype,
                        accum1, accum2):
    """One grid step: NB images, both convs, folded (eval-mode) BN + ReLU."""
    patch_ref = scratch[0] if scratch else None
    NB, cin_p, HW = x_ref.shape
    cmid_p = b1_ref.shape[0]

    # Tap order is (kh, kw) row-major, matching the weight layout built in the
    # wrapper: patch row k*Cp + c / weight tap index k <-> (kh, kw), channel c.
    shifts = [(kh - 1) * W + (kw - 1) for kh in range(3) for kw in range(3)]

    # Boundary masks built in-kernel from the tiny (2, HW) row/col index input
    # (cheap VPU compares; no 9-mask DMA).  Hoisted out of all loops.
    row = rowcol_ref[0:1, :]                   # (1, HW) int32
    col = rowcol_ref[1:2, :]
    row_ok = {-1: row >= 1, 0: None, 1: row <= H - 2}
    col_ok = {-1: col >= 1, 0: None, 1: col <= W - 2}
    masks = []
    for kh in range(3):
        for kw in range(3):
            m = None
            for part in (row_ok[kh - 1], col_ok[kw - 1]):
                if part is not None:
                    m = part if m is None else jnp.logical_and(m, part)
            masks.append(m)

    b1 = b1_ref[...]                           # (cmid_p, 1) f32 (scale folded into w)
    b2 = b2_ref[...]                           # (cout, 1)   f32

    def taps(a):
        # a: (Cp, HW) compute_dtype.  Yield the 9 shifted+masked taps; circular
        # wrap from the roll is killed by the boundary mask of that tap.
        for k, d in enumerate(shifts):
            t = a if d == 0 else pltpu.roll(a, shift=(-d) % HW, axis=1)
            if masks[k] is not None:
                t = jnp.where(masks[k], t, 0)
            yield k, t

    def conv3x3(a, w_ref, accum, cp):
        if accum:
            # Deep-channel path: 9 accumulated matmuls, no patch matrix.
            acc = None
            for k, t in taps(a):
                part = jnp.dot(w_ref[k], t, preferred_element_type=jnp.float32)
                acc = part if acc is None else acc + part
            return acc
        # im2col path: write taps into the shared VMEM scratch, one big matmul.
        for k, t in taps(a):
            patch_ref[k * cp:(k + 1) * cp, :] = t
        return jnp.dot(w_ref[...], patch_ref[0:9 * cp, :],
                       preferred_element_type=jnp.float32)

    # Per-image loop (bounds live ranges to a single image's intermediates).
    @pl.loop(0, NB)
    def _(b):
        a0 = x_ref[b]                                           # (cin_p, HW)
        h1 = jnp.maximum(conv3x3(a0, w1_ref, accum1, cin_p) + b1, 0.0)
        a1 = h1.astype(compute_dtype)                           # (cmid_p, HW)
        h2 = conv3x3(a1, w2_ref, accum2, cmid_p) + b2
        if use_act:
            h2 = jnp.maximum(h2, 0.0)
        o_ref[b] = h2.astype(o_ref.dtype)                       # lane-dense store


def _fold_conv_bn(w_oihw, b, gamma, beta, mean, var, *, cin_p, cout_p, eps,
                  compute_dtype, accum):
    """OIHW weight + conv bias + eval-mode BN -> folded weight (scale baked in,
    f32 fold then compute_dtype cast) and f32 bias."""
    cout, cin = w_oihw.shape[0], w_oihw.shape[1]
    scale = gamma / jnp.sqrt(var + eps)                          # (cout,)
    bias = (b - mean) * scale + beta                             # (cout,)
    w = w_oihw.astype(jnp.float32) * scale[:, None, None, None]  # fold in f32
    w = jnp.transpose(w, (0, 2, 3, 1))                           # (O, kh, kw, I)
    w = jnp.pad(w, ((0, cout_p - cout), (0, 0), (0, 0), (0, cin_p - cin)))
    if accum:
        w = jnp.transpose(w.reshape(cout_p, 9, cin_p), (1, 0, 2))   # (9, O, I)
    else:
        w = w.reshape(cout_p, 9 * cin_p)                            # (O, 9*I)
    w = w.astype(compute_dtype)
    bias = jnp.pad(bias, (0, cout_p - cout)).reshape(cout_p, 1).astype(jnp.float32)
    return w, bias


def double_conv_block(x_nchw, params, *, use_act=True, eps=1e-5,
                      compute_dtype=jnp.bfloat16, out_dtype=None,
                      nb=None, tap_accum=None):
    """Pallas implementation of DoubleConvBlock.forward (stride=1, eval-mode BN)."""
    N, Cin, H, W = x_nchw.shape
    HW = H * W
    Cmid = params['w1'].shape[0]
    Cout = params['w2'].shape[0]
    cd = jnp.dtype(compute_dtype).itemsize
    out_dtype = x_nchw.dtype if out_dtype is None else out_dtype
    od = jnp.dtype(out_dtype).itemsize

    is_v7, vmem_cap = _device_info()

    # Pad contraction channels to the dtype packing multiple (16 for bf16,
    # 8 for f32, 32 for fp8) so every tap is a whole packed tile.
    mult = max(8, (8 * 4) // cd)
    cin_p = _round_up(Cin, mult)
    cmid_p = _round_up(Cmid, mult)

    # Conv formulation per conv: im2col for shallow channels, 9 accumulated
    # matmuls for deep channels (preferred earlier on VMEM-tight v7x).
    thr = 64 if is_v7 else 128
    accum1 = bool(tap_accum) if tap_accum is not None else cin_p >= thr
    accum2 = bool(tap_accum) if tap_accum is not None else cmid_p >= thr
    im2col_cps = [cp for cp, a in ((cin_p, accum1), (cmid_p, accum2)) if not a]
    patch_rows = 9 * max(im2col_cps) if im2col_cps else 0

    # Free layout change: NCHW -> (N, C, H*W); only the tiny channel pad
    # materialises anything new.
    x = x_nchw.reshape(N, Cin, HW)
    if cin_p != Cin:
        x = jnp.pad(x, ((0, 0), (0, cin_p - Cin), (0, 0)))
    x = x.astype(compute_dtype)

    # Tiny (2, HW) int32 row/col index input for in-kernel boundary masks.
    rows = np.repeat(np.arange(H, dtype=np.int32), W)
    cols = np.tile(np.arange(W, dtype=np.int32), H)
    rowcol = jnp.asarray(np.stack([rows, cols], axis=0))

    w1, b1 = _fold_conv_bn(params['w1'], params['b1'], params['g1'],
                           params['be1'], params['m1'], params['v1'],
                           cin_p=cin_p, cout_p=cmid_p, eps=eps,
                           compute_dtype=compute_dtype, accum=accum1)
    w2, b2 = _fold_conv_bn(params['w2'], params['b2'], params['g2'],
                           params['be2'], params['m2'], params['v2'],
                           cin_p=cmid_p, cout_p=Cout, eps=eps,
                           compute_dtype=compute_dtype, accum=accum2)

    # Generation-aware VMEM budget; count in-kernel intermediates, not just I/O.
    budget = min(int(vmem_cap * 0.75), 100 * 1024 * 1024)
    est = functools.partial(_vmem_estimate, cin_p=cin_p, cmid_p=cmid_p,
                            cout=Cout, HW=HW, cd=cd, od=od,
                            patch_rows=patch_rows)
    if nb is None:
        nb = max(1, min(N, 8))
        if is_v7 and N > 1:                 # keep >=2 grid steps only for 2-TC v7x
            nb = max(1, min(nb, N // 2))
        while nb > 1 and (N % nb or est(nb) > budget):
            nb -= 1
    assert N % nb == 0, (N, nb)
    vmem_limit = int(min(vmem_cap - 4 * 1024 * 1024,
                         max(est(nb) + 16 * 1024 * 1024, 32 * 1024 * 1024)))

    kernel = functools.partial(_double_conv_kernel, H=H, W=W, use_act=use_act,
                               compute_dtype=compute_dtype,
                               accum1=accum1, accum2=accum2)

    def _full(shape):
        return pl.BlockSpec(shape, lambda g, _n=len(shape): (0,) * _n)

    scratch_shapes = ([pltpu.VMEM((patch_rows, HW), compute_dtype)]
                      if patch_rows else [])

    out = pl.pallas_call(
        kernel,
        out_shape=jax.ShapeDtypeStruct((N, Cout, HW), out_dtype),
        grid_spec=pltpu.PrefetchScalarGridSpec(
            num_scalar_prefetch=0,
            grid=(N // nb,),
            in_specs=[
                _full((2, HW)),                                      # row/col iota
                pl.BlockSpec((nb, cin_p, HW), lambda g: (g, 0, 0)),  # activations
                _full(w1.shape), _full((cmid_p, 1)),
                _full(w2.shape), _full((Cout, 1)),
            ],
            out_specs=pl.BlockSpec((nb, Cout, HW), lambda g: (g, 0, 0)),
            scratch_shapes=scratch_shapes,
        ),
        compiler_params=pltpu.CompilerParams(
            dimension_semantics=("parallel",),
            vmem_limit_bytes=vmem_limit),
    )(rowcol, x, w1, b1, w2, b2)

    return out.reshape(N, Cout, H, W)        # free reshape back to NCHW


def reference(x_nchw, params, *, use_act=True, eps=1e-5):
    """Plain-JAX reference matching PyTorch DoubleConvBlock in eval mode."""
    def conv(x, w, b):
        y = lax.conv_general_dilated(
            x, w, window_strides=(1, 1), padding=((1, 1), (1, 1)),
            dimension_numbers=('NCHW', 'OIHW', 'NCHW'))
        return y + b[None, :, None, None]

    def bn(x, gamma, beta, mean, var):
        inv = gamma / jnp.sqrt(var + eps)
        return (x - mean[None, :, None, None]) * inv[None, :, None, None] \
            + beta[None, :, None, None]

    y = jax.nn.relu(bn(conv(x_nchw, params['w1'], params['b1']),
                       params['g1'], params['be1'], params['m1'], params['v1']))
    y = bn(conv(y, params['w2'], params['b2']),
           params['g2'], params['be2'], params['m2'], params['v2'])
    if use_act:
        y = jax.nn.relu(y)
    return y


if __name__ == "__main__":
    key = jax.random.PRNGKey(0)
    N, Cin, Cmid, Cout, H, W = 2, 4, 8, 8, 16, 16
    ks = jax.random.split(key, 13)

    x = jax.random.normal(ks[0], (N, Cin, H, W), jnp.float32)
    params = dict(
        # conv1 / bn1
        w1=0.1 * jax.random.normal(ks[1], (Cmid, Cin, 3, 3), jnp.float32),
        b1=0.1 * jax.random.normal(ks[2], (Cmid,), jnp.float32),
        g1=1.0 + 0.1 * jax.random.normal(ks[3], (Cmid,), jnp.float32),
        be1=0.1 * jax.random.normal(ks[4], (Cmid,), jnp.float32),
        m1=0.1 * jax.random.normal(ks[5], (Cmid,), jnp.float32),
        v1=jax.random.uniform(ks[6], (Cmid,), jnp.float32, 0.5, 1.5),
        # conv2 / bn2
        w2=0.1 * jax.random.normal(ks[7], (Cout, Cmid, 3, 3), jnp.float32),
        b2=0.1 * jax.random.normal(ks[8], (Cout,), jnp.float32),
        g2=1.0 + 0.1 * jax.random.normal(ks[9], (Cout,), jnp.float32),
        be2=0.1 * jax.random.normal(ks[10], (Cout,), jnp.float32),
        m2=0.1 * jax.random.normal(ks[11], (Cout,), jnp.float32),
        v2=jax.random.uniform(ks[12], (Cout,), jnp.float32, 0.5, 1.5),
    )

    ref_act = jax.block_until_ready(reference(x, params, use_act=True))
    ref_noact = jax.block_until_ready(reference(x, params, use_act=False))

    # 1) f32 MXU path, im2col formulation: tight semantic check.
    out_f32 = jax.block_until_ready(
        double_conv_block(x, params, use_act=True, compute_dtype=jnp.float32))
    assert out_f32.shape == (N, Cout, H, W), out_f32.shape
    err32 = float(jnp.max(jnp.abs(out_f32 - ref_act)))
    assert jnp.allclose(out_f32, ref_act, atol=3e-4, rtol=3e-4), \
        f"f32 im2col path max abs err {err32}"

    # 2) default bf16-MXU path (f32 accumulation): fast path, looser tolerance
    #    reflecting bf16 operand rounding only.
    out_bf = jax.block_until_ready(double_conv_block(x, params, use_act=True))
    assert out_bf.shape == (N, Cout, H, W), out_bf.shape
    errbf = float(jnp.max(jnp.abs(out_bf.astype(jnp.float32) - ref_act)))
    assert jnp.allclose(out_bf.astype(jnp.float32), ref_act,
                        atol=5e-2, rtol=5e-2), f"bf16 path max abs err {errbf}"

    # 3) forced tap-accumulation (deep-channel / v7x-preferred) path in f32,
    #    also exercising use_act=False: tight semantic check.
    out_acc = jax.block_until_ready(
        double_conv_block(x, params, use_act=False, compute_dtype=jnp.float32,
                          tap_accum=True))
    assert out_acc.shape == (N, Cout, H, W), out_acc.shape
    erracc = float(jnp.max(jnp.abs(out_acc - ref_noact)))
    assert jnp.allclose(out_acc, ref_noact, atol=3e-4, rtol=3e-4), \
        f"tap-accum path max abs err {erracc}"

    print("KERNEL_OK")
</pallas_src>

<mosaic_0001>
module attributes {stable_mosaic.version = 11 : i64} {
  func.func @_double_conv_kernel(%arg0: i32, %arg1: memref<2x256xi32, #tpu.memory_space<vmem>>, %arg2: memref<2x8x256xf32, #tpu.memory_space<vmem>>, %arg3: memref<8x72xf32, #tpu.memory_space<vmem>>, %arg4: memref<8x1xf32, #tpu.memory_space<vmem>>, %arg5: memref<8x72xf32, #tpu.memory_space<vmem>>, %arg6: memref<8x1xf32, #tpu.memory_space<vmem>>, %arg7: memref<2x8x256xf32, #tpu.memory_space<vmem>>, %arg8: memref<72x256xf32, #tpu.memory_space<vmem>>) attributes {dimension_semantics = [#tpu.dimension_semantics<parallel>], iteration_bounds = array<i64: 1>, scalar_prefetch = 0 : i64, scratch_operands = 1 : i64, tpu.core_type = #tpu.core_type<tc>, window_params = [{pipeline_mode = #tpu.pipeline_mode<synchronous>, transform_indices = @transform_0, window_bounds = array<i64: 2, 256>}, {transform_indices = @transform_1, window_bounds = array<i64: 2, 8, 256>}, {pipeline_mode = #tpu.pipeline_mode<synchronous>, transform_indices = @transform_2, window_bounds = array<i64: 8, 72>}, {pipeline_mode = #tpu.pipeline_mode<synchronous>, transform_indices = @transform_3, window_bounds = array<i64: 8, 1>}, {pipeline_mode = #tpu.pipeline_mode<synchronous>, transform_indices = @transform_4, window_bounds = array<i64: 8, 72>}, {pipeline_mode = #tpu.pipeline_mode<synchronous>, transform_indices = @transform_5, window_bounds = array<i64: 8, 1>}, {transform_indices = @transform_6, window_bounds = array<i64: 2, 8, 256>}]} {
    %c0 = arith.constant 0 : index
    %c0_0 = arith.constant 0 : index
    %0 = vector.load %arg1[%c0, %c0_0] : memref<2x256xi32, #tpu.memory_space<vmem>>, vector<1x256xi32>
    %c1 = arith.constant 1 : index
    %c0_1 = arith.constant 0 : index
    %1 = vector.load %arg1[%c1, %c0_1] : memref<2x256xi32, #tpu.memory_space<vmem>>, vector<1x256xi32>
    %c1_i32 = arith.constant 1 : i32
    %2 = vector.broadcast %c1_i32 : i32 to vector<1x256xi32>
    %3 = arith.cmpi sge, %0, %2 : vector<1x256xi32>
    %c14_i32 = arith.constant 14 : i32
    %4 = vector.broadcast %c14_i32 : i32 to vector<1x256xi32>
    %5 = arith.cmpi sle, %0, %4 : vector<1x256xi32>
    %c1_i32_2 = arith.constant 1 : i32
    %6 = vector.broadcast %c1_i32_2 : i32 to vector<1x256xi32>
    %7 = arith.cmpi sge, %1, %6 : vector<1x256xi32>
    %c14_i32_3 = arith.constant 14 : i32
    %8 = vector.broadcast %c14_i32_3 : i32 to vector<1x256xi32>
    %9 = arith.cmpi sle, %1, %8 : vector<1x256xi32>
    %10 = arith.andi %3, %7 : vector<1x256xi1>
    %11 = arith.andi %3, %9 : vector<1x256xi1>
    %12 = arith.andi %5, %7 : vector<1x256xi1>
    %13 = arith.andi %5, %9 : vector<1x256xi1>
    %c0_4 = arith.constant 0 : index
    %c0_5 = arith.constant 0 : index
    %14 = vector.load %arg4[%c0_4, %c0_5] : memref<8x1xf32, #tpu.memory_space<vmem>>, vector<8x1xf32>
    %c0_6 = arith.constant 0 : index
    %c0_7 = arith.constant 0 : index
    %15 = vector.load %arg6[%c0_6, %c0_7] : memref<8x1xf32, #tpu.memory_space<vmem>>, vector<8x1xf32>
    %c0_i32 = arith.constant 0 : i32
    %c2_i32 = arith.constant 2 : i32
    %16 = arith.addi %c0_i32, %c2_i32 : i32
    %c1_i32_8 = arith.constant 1 : i32
    scf.for %arg9 = %c0_i32 to %16 step %c1_i32_8  : i32 {
      %c1_i32_10 = arith.constant 1 : i32
      %17 = arith.muli %arg9, %c1_i32_10 : i32
      %c0_i32_11 = arith.constant 0 : i32
      %18 = arith.addi %c0_i32_11, %17 : i32
      %19 = arith.index_cast %18 : i32 to index
      %c0_12 = arith.constant 0 : index
      %c0_13 = arith.constant 0 : index
      %20 = vector.load %arg2[%19, %c0_12, %c0_13] : memref<2x8x256xf32, #tpu.memory_space<vmem>>, vector<1x8x256xf32>
      %21 = vector.shape_cast %20 : vector<1x8x256xf32> to vector<8x256xf32>
      %c17_i32 = arith.constant 17 : i32
      %22 = tpu.dynamic_rotate %21 by %c17_i32 dim 1 : vector<8x256xf32>, i32 -> vector<8x256xf32>
      %c0_i32_14 = arith.constant 0 : i32
      %23 = arith.sitofp %c0_i32_14 : i32 to f32
      %24 = vector.shape_cast %10 : vector<1x256xi1> to vector<1x256xi1>
      %25 = vector.broadcast %24 : vector<1x256xi1> to vector<8x256xi1>
      %26 = vector.broadcast %23 : f32 to vector<8x256xf32>
      %27 = arith.select %25, %22, %26 : vector<8x256xi1>, vector<8x256xf32>
      %c0_15 = arith.constant 0 : index
      %c0_16 = arith.constant 0 : index
      %28 = vector.load %arg8[%c0_15, %c0_16] : memref<72x256xf32, #tpu.memory_space<vmem>>, vector<8x256xf32>
      tpu.vector_store %arg8[%c0_15, %c0_16], %27 {strides = array<i32>} : memref<72x256xf32, #tpu.memory_space<vmem>>, vector<8x256xf32>,
      %c16_i32 = arith.constant 16 : i32
      %29 = tpu.dynamic_rotate %21 by %c16_i32 dim 1 : vector<8x256xf32>, i32 -> vector<8x256xf32>
      %c0_i32_17 = arith.constant 0 : i32
      %30 = arith.sitofp %c0_i32_17 : i32 to f32
      %31 = vector.shape_cast %3 : vector<1x256xi1> to vector<1x256xi1>
      %32 = vector.broadcast %31 : vector<1x256xi1> to vector<8x256xi1>
      %33 = vector.broadcast %30 : f32 to vector<8x256xf32>
      %34 = arith.select %32, %29, %33 : vector<8x256xi1>, vector<8x256xf32>
      %c8 = arith.constant 8 : index
      %c0_18 = arith.constant 0 : index
      %35 = vector.load %arg8[%c8, %c0_18] : memref<72x256xf32, #tpu.memory_space<vmem>>, vector<8x256xf32>
      tpu.vector_store %arg8[%c8, %c0_18], %34 {strides = array<i32>} : memref<72x256xf32, #tpu.memory_space<vmem>>, vector<8x256xf32>,
      %c15_i32 = arith.constant 15 : i32
      %36 = tpu.dynamic_rotate %21 by %c15_i32 dim 1 : vector<8x256xf32>, i32 -> vector<8x256xf32>
      %c0_i32_19 = arith.constant 0 : i32
      %37 = arith.sitofp %c0_i32_19 : i32 to f32
      %38 = vector.shape_cast %11 : vector<1x256xi1> to vector<1x256xi1>
      %39 = vector.broadcast %38 : vector<1x256xi1> to vector<8x256xi1>
      %40 = vector.broadcast %37 : f32 to vector<8x256xf32>
      %41 = arith.select %39, %36, %40 : vector<8x256xi1>, vector<8x256xf32>
      %c16 = arith.constant 16 : index
      %c0_20 = arith.constant 0 : index
      %42 = vector.load %arg8[%c16, %c0_20] : memref<72x256xf32, #tpu.memory_space<vmem>>, vector<8x256xf32>
      tpu.vector_store %arg8[%c16, %c0_20], %41 {strides = array<i32>} : memref<72x256xf32, #tpu.memory_space<vmem>>, vector<8x256xf32>,
      %c1_i32_21 = arith.constant 1 : i32
      %43 = tpu.dynamic_rotate %21 by %c1_i32_21 dim 1 : vector<8x256xf32>, i32 -> vector<8x256xf32>
      %c0_i32_22 = arith.constant 0 : i32
      %44 = arith.sitofp %c0_i32_22 : i32 to f32
      %45 = vector.shape_cast %7 : vector<1x256xi1> to vector<1x256xi1>
      %46 = vector.broadcast %45 : vector<1x256xi1> to vector<8x256xi1>
      %47 = vector.broadcast %44 : f32 to vector<8x256xf32>
      %48 = arith.select %46, %43, %47 : vector<8x256xi1>, vector<8x256xf32>
      %c24 = arith.constant 24 : index
      %c0_23 = arith.constant 0 : index
      %49 = vector.load %arg8[%c24, %c0_23] : memref<72x256xf32, #tpu.memory_space<vmem>>, vector<8x256xf32>
      tpu.vector_store %arg8[%c24, %c0_23], %48 {strides = array<i32>} : memref<72x256xf32, #tpu.memory_space<vmem>>, vector<8x256xf32>,
      %c32 = arith.constant 32 : index
      %c0_24 = arith.constant 0 : index
      %50 = vector.load %arg8[%c32, %c0_24] : memref<72x256xf32, #tpu.memory_space<vmem>>, vector<8x256xf32>
      tpu.vector_store %arg8[%c32, %c0_24], %21 {strides = array<i32>} : memref<72x256xf32, #tpu.memory_space<vmem>>, vector<8x256xf32>,
      %c255_i32 = arith.constant 255 : i32
      %51 = tpu.dynamic_rotate %21 by %c255_i32 dim 1 : vector<8x256xf32>, i32 -> vector<8x256xf32>
      %c0_i32_25 = arith.constant 0 : i32
      %52 = arith.sitofp %c0_i32_25 : i32 to f32
      %53 = vector.shape_cast %9 : vector<1x256xi1> to vector<1x256xi1>
      %54 = vector.broadcast %53 : vector<1x256xi1> to vector<8x256xi1>
      %55 = vector.broadcast %52 : f32 to vector<8x256xf32>
      %56 = arith.select %54, %51, %55 : vector<8x256xi1>, vector<8x256xf32>
      %c40 = arith.constant 40 : index
      %c0_26 = arith.constant 0 : index
      %57 = vector.load %arg8[%c40, %c0_26] : memref<72x256xf32, #tpu.memory_space<vmem>>, vector<8x256xf32>
      tpu.vector_store %arg8[%c40, %c0_26], %56 {strides = array<i32>} : memref<72x256xf32, #tpu.memory_space<vmem>>, vector<8x256xf32>,
      %c241_i32 = arith.constant 241 : i32
      %58 = tpu.dynamic_rotate %21 by %c241_i32 dim 1 : vector<8x256xf32>, i32 -> vector<8x256xf32>
      %c0_i32_27 = arith.constant 0 : i32
      %59 = arith.sitofp %c0_i32_27 : i32 to f32
      %60 = vector.shape_cast %12 : vector<1x256xi1> to vector<1x256xi1>
      %61 = vector.broadcast %60 : vector<1x256xi1> to vector<8x256xi1>
      %62 = vector.broadcast %59 : f32 to vector<8x256xf32>
      %63 = arith.select %61, %58, %62 : vector<8x256xi1>, vector<8x256xf32>
      %c48 = arith.constant 48 : index
      %c0_28 = arith.constant 0 : index
      %64 = vector.load %arg8[%c48, %c0_28] : memref<72x256xf32, #tpu.memory_space<vmem>>, vector<8x256xf32>
      tpu.vector_store %arg8[%c48, %c0_28], %63 {strides = array<i32>} : memref<72x256xf32, #tpu.memory_space<vmem>>, vector<8x256xf32>,
      %c240_i32 = arith.constant 240 : i32
      %65 = tpu.dynamic_rotate %21 by %c240_i32 dim 1 : vector<8x256xf32>, i32 -> vector<8x256xf32>
      %c0_i32_29 = arith.constant 0 : i32
      %66 = arith.sitofp %c0_i32_29 : i32 to f32
      %67 = vector.shape_cast %5 : vector<1x256xi1> to vector<1x256xi1>
      %68 = vector.broadcast %67 : vector<1x256xi1> to vector<8x256xi1>
      %69 = vector.broadcast %66 : f32 to vector<8x256xf32>
      %70 = arith.select %68, %65, %69 : vector<8x256xi1>, vector<8x256xf32>
      %c56 = arith.constant 56 : index
      %c0_30 = arith.constant 0 : index
      %71 = vector.load %arg8[%c56, %c0_30] : memref<72x256xf32, #tpu.memory_space<vmem>>, vector<8x256xf32>
      tpu.vector_store %arg8[%c56, %c0_30], %70 {strides = array<i32>} : memref<72x256xf32, #tpu.memory_space<vmem>>, vector<8x256xf32>,
      %c239_i32 = arith.constant 239 : i32
      %72 = tpu.dynamic_rotate %21 by %c239_i32 dim 1 : vector<8x256xf32>, i32 -> vector<8x256xf32>
      %c0_i32_31 = arith.constant 0 : i32
      %73 = arith.sitofp %c0_i32_31 : i32 to f32
      %74 = vector.shape_cast %13 : vector<1x256xi1> to vector<1x256xi1>
      %75 = vector.broadcast %74 : vector<1x256xi1> to vector<8x256xi1>
      %76 = vector.broadcast %73 : f32 to vector<8x256xf32>
      %77 = arith.select %75, %72, %76 : vector<8x256xi1>, vector<8x256xf32>
      %c64 = arith.constant 64 : index
      %c0_32 = arith.constant 0 : index
      %78 = vector.load %arg8[%c64, %c0_32] : memref<72x256xf32, #tpu.memory_space<vmem>>, vector<8x256xf32>
      tpu.vector_store %arg8[%c64, %c0_32], %77 {strides = array<i32>} : memref<72x256xf32, #tpu.memory_space<vmem>>, vector<8x256xf32>,
      %c0_33 = arith.constant 0 : index
      %c0_34 = arith.constant 0 : index
      %79 = vector.load %arg3[%c0_33, %c0_34] : memref<8x72xf32, #tpu.memory_space<vmem>>, vector<8x72xf32>
      %c0_35 = arith.constant 0 : index
      %c0_36 = arith.constant 0 : index
      %80 = vector.load %arg8[%c0_35, %c0_36] : memref<72x256xf32, #tpu.memory_space<vmem>>, vector<72x256xf32>
      %cst = arith.constant dense<0.000000e+00> : vector<8x256xf32>
      %81 = tpu.matmul %79, %80, %cst {dimension_numbers = #tpu.dot_dimension_numbers<[1], [0], [0], [1], [0, 0, 1, 1], [], []>} : vector<8x72xf32>, vector<72x256xf32>, vector<8x256xf32> -> vector<8x256xf32>
      %82 = vector.broadcast %14 : vector<8x1xf32> to vector<8x256xf32>
      %83 = arith.addf %81, %82 : vector<8x256xf32>
      %cst_37 = arith.constant 0.000000e+00 : f32
      %84 = vector.broadcast %cst_37 : f32 to vector<8x256xf32>
      %85 = arith.maximumf %83, %84 : vector<8x256xf32>
      %c17_i32_38 = arith.constant 17 : i32
      %86 = tpu.dynamic_rotate %85 by %c17_i32_38 dim 1 : vector<8x256xf32>, i32 -> vector<8x256xf32>
      %c0_i32_39 = arith.constant 0 : i32
      %87 = arith.sitofp %c0_i32_39 : i32 to f32
      %88 = vector.shape_cast %10 : vector<1x256xi1> to vector<1x256xi1>
      %89 = vector.broadcast %88 : vector<1x256xi1> to vector<8x256xi1>
      %90 = vector.broadcast %87 : f32 to vector<8x256xf32>
      %91 = arith.select %89, %86, %90 : vector<8x256xi1>, vector<8x256xf32>
      %c0_40 = arith.constant 0 : index
      %c0_41 = arith.constant 0 : index
      %92 = vector.load %arg8[%c0_40, %c0_41] : memref<72x256xf32, #tpu.memory_space<vmem>>, vector<8x256xf32>
      tpu.vector_store %arg8[%c0_40, %c0_41], %91 {strides = array<i32>} : memref<72x256xf32, #tpu.memory_space<vmem>>, vector<8x256xf32>,
      %c16_i32_42 = arith.constant 16 : i32
      %93 = tpu.dynamic_rotate %85 by %c16_i32_42 dim 1 : vector<8x256xf32>, i32 -> vector<8x256xf32>
      %c0_i32_43 = arith.constant 0 : i32
      %94 = arith.sitofp %c0_i32_43 : i32 to f32
      %95 = vector.shape_cast %3 : vector<1x256xi1> to vector<1x256xi1>
      %96 = vector.broadcast %95 : vector<1x256xi1> to vector<8x256xi1>
      %97 = vector.broadcast %94 : f32 to vector<8x256xf32>
      %98 = arith.select %96, %93, %97 : vector<8x256xi1>, vector<8x256xf32>
      %c8_44 = arith.constant 8 : index
      %c0_45 = arith.constant 0 : index
      %99 = vector.load %arg8[%c8_44, %c0_45] : memref<72x256xf32, #tpu.memory_space<vmem>>, vector<8x256xf32>
      tpu.vector_store %arg8[%c8_44, %c0_45], %98 {strides = array<i32>} : memref<72x256xf32, #tpu.memory_space<vmem>>, vector<8x256xf32>,
      %c15_i32_46 = arith.constant 15 : i32
      %100 = tpu.dynamic_rotate %85 by %c15_i32_46 dim 1 : vector<8x256xf32>, i32 -> vector<8x256xf32>
      %c0_i32_47 = arith.constant 0 : i32
      %101 = arith.sitofp %c0_i32_47 : i32 to f32
      %102 = vector.shape_cast %11 : vector<1x256xi1> to vector<1x256xi1>
      %103 = vector.broadcast %102 : vector<1x256xi1> to vector<8x256xi1>
      %104 = vector.broadcast %101 : f32 to vector<8x256xf32>
      %105 = arith.select %103, %100, %104 : vector<8x256xi1>, vector<8x256xf32>
      %c16_48 = arith.constant 16 : index
      %c0_49 = arith.constant 0 : index
      %106 = vector.load %arg8[%c16_48, %c0_49] : memref<72x256xf32, #tpu.memory_space<vmem>>, vector<8x256xf32>
      tpu.vector_store %arg8[%c16_48, %c0_49], %105 {strides = array<i32>} : memref<72x256xf32, #tpu.memory_space<vmem>>, vector<8x256xf32>,
      %c1_i32_50 = arith.constant 1 : i32
      %107 = tpu.dynamic_rotate %85 by %c1_i32_50 dim 1 : vector<8x256xf32>, i32 -> vector<8x256xf32>
      %c0_i32_51 = arith.constant 0 : i32
      %108 = arith.sitofp %c0_i32_51 : i32 to f32
      %109 = vector.shape_cast %7 : vector<1x256xi1> to vector<1x256xi1>
      %110 = vector.broadcast %109 : vector<1x256xi1> to vector<8x256xi1>
      %111 = vector.broadcast %108 : f32 to vector<8x256xf32>
      %112 = arith.select %110, %107, %111 : vector<8x256xi1>, vector<8x256xf32>
      %c24_52 = arith.constant 24 : index
      %c0_53 = arith.constant 0 : index
      %113 = vector.load %arg8[%c24_52, %c0_53] : memref<72x256xf32, #tpu.memory_space<vmem>>, vector<8x256xf32>
      tpu.vector_store %arg8[%c24_52, %c0_53], %112 {strides = array<i32>} : memref<72x256xf32, #tpu.memory_space<vmem>>, vector<8x256xf32>,
      %c32_54 = arith.constant 32 : index
      %c0_55 = arith.constant 0 : index
      %114 = vector.load %arg8[%c32_54, %c0_55] : memref<72x256xf32, #tpu.memory_space<vmem>>, vector<8x256xf32>
      tpu.vector_store %arg8[%c32_54, %c0_55], %85 {strides = array<i32>} : memref<72x256xf32, #tpu.memory_space<vmem>>, vector<8x256xf32>,
      %c255_i32_56 = arith.constant 255 : i32
      %115 = tpu.dynamic_rotate %85 by %c255_i32_56 dim 1 : vector<8x256xf32>, i32 -> vector<8x256xf32>
      %c0_i32_57 = arith.constant 0 : i32
      %116 = arith.sitofp %c0_i32_57 : i32 to f32
      %117 = vector.shape_cast %9 : vector<1x256xi1> to vector<1x256xi1>
      %118 = vector.broadcast %117 : vector<1x256xi1> to vector<8x256xi1>
      %119 = vector.broadcast %116 : f32 to vector<8x256xf32>
      %120 = arith.select %118, %115, %119 : vector<8x256xi1>, vector<8x256xf32>
      %c40_58 = arith.constant 40 : index
      %c0_59 = arith.constant 0 : index
      %121 = vector.load %arg8[%c40_58, %c0_59] : memref<72x256xf32, #tpu.memory_space<vmem>>, vector<8x256xf32>
      tpu.vector_store %arg8[%c40_58, %c0_59], %120 {strides = array<i32>} : memref<72x256xf32, #tpu.memory_space<vmem>>, vector<8x256xf32>,
      %c241_i32_60 = arith.constant 241 : i32
      %122 = tpu.dynamic_rotate %85 by %c241_i32_60 dim 1 : vector<8x256xf32>, i32 -> vector<8x256xf32>
      %c0_i32_61 = arith.constant 0 : i32
      %123 = arith.sitofp %c0_i32_61 : i32 to f32
      %124 = vector.shape_cast %12 : vector<1x256xi1> to vector<1x256xi1>
      %125 = vector.broadcast %124 : vector<1x256xi1> to vector<8x256xi1>
      %126 = vector.broadcast %123 : f32 to vector<8x256xf32>
      %127 = arith.select %125, %122, %126 : vector<8x256xi1>, vector<8x256xf32>
      %c48_62 = arith.constant 48 : index
      %c0_63 = arith.constant 0 : index
      %128 = vector.load %arg8[%c48_62, %c0_63] : memref<72x256xf32, #tpu.memory_space<vmem>>, vector<8x256xf32>
      tpu.vector_store %arg8[%c48_62, %c0_63], %127 {strides = array<i32>} : memref<72x256xf32, #tpu.memory_space<vmem>>, vector<8x256xf32>,
      %c240_i32_64 = arith.constant 240 : i32
      %129 = tpu.dynamic_rotate %85 by %c240_i32_64 dim 1 : vector<8x256xf32>, i32 -> vector<8x256xf32>
      %c0_i32_65 = arith.constant 0 : i32
      %130 = arith.sitofp %c0_i32_65 : i32 to f32
      %131 = vector.shape_cast %5 : vector<1x256xi1> to vector<1x256xi1>
      %132 = vector.broadcast %131 : vector<1x256xi1> to vector<8x256xi1>
      %133 = vector.broadcast %130 : f32 to vector<8x256xf32>
      %134 = arith.select %132, %129, %133 : vector<8x256xi1>, vector<8x256xf32>
      %c56_66 = arith.constant 56 : index
      %c0_67 = arith.constant 0 : index
      %135 = vector.load %arg8[%c56_66, %c0_67] : memref<72x256xf32, #tpu.memory_space<vmem>>, vector<8x256xf32>
      tpu.vector_store %arg8[%c56_66, %c0_67], %134 {strides = array<i32>} : memref<72x256xf32, #tpu.memory_space<vmem>>, vector<8x256xf32>,
      %c239_i32_68 = arith.constant 239 : i32
      %136 = tpu.dynamic_rotate %85 by %c239_i32_68 dim 1 : vector<8x256xf32>, i32 -> vector<8x256xf32>
      %c0_i32_69 = arith.constant 0 : i32
      %137 = arith.sitofp %c0_i32_69 : i32 to f32
      %138 = vector.shape_cast %13 : vector<1x256xi1> to vector<1x256xi1>
      %139 = vector.broadcast %138 : vector<1x256xi1> to vector<8x256xi1>
      %140 = vector.broadcast %137 : f32 to vector<8x256xf32>
      %141 = arith.select %139, %136, %140 : vector<8x256xi1>, vector<8x256xf32>
      %c64_70 = arith.constant 64 : index
      %c0_71 = arith.constant 0 : index
      %142 = vector.load %arg8[%c64_70, %c0_71] : memref<72x256xf32, #tpu.memory_space<vmem>>, vector<8x256xf32>
      tpu.vector_store %arg8[%c64_70, %c0_71], %141 {strides = array<i32>} : memref<72x256xf32, #tpu.memory_space<vmem>>, vector<8x256xf32>,
      %c0_72 = arith.constant 0 : index
      %c0_73 = arith.constant 0 : index
      %143 = vector.load %arg5[%c0_72, %c0_73] : memref<8x72xf32, #tpu.memory_space<vmem>>, vector<8x72xf32>
      %c0_74 = arith.constant 0 : index
      %c0_75 = arith.constant 0 : index
      %144 = vector.load %arg8[%c0_74, %c0_75] : memref<72x256xf32, #tpu.memory_space<vmem>>, vector<72x256xf32>
      %cst_76 = arith.constant dense<0.000000e+00> : vector<8x256xf32>
      %145 = tpu.matmul %143, %144, %cst_76 {dimension_numbers = #tpu.dot_dimension_numbers<[1], [0], [0], [1], [0, 0, 1, 1], [], []>} : vector<8x72xf32>, vector<72x256xf32>, vector<8x256xf32> -> vector<8x256xf32>
      %146 = vector.broadcast %15 : vector<8x1xf32> to vector<8x256xf32>
      %147 = arith.addf %145, %146 : vector<8x256xf32>
      %cst_77 = arith.constant 0.000000e+00 : f32
      %148 = vector.broadcast %cst_77 : f32 to vector<8x256xf32>
      %149 = arith.maximumf %147, %148 : vector<8x256xf32>
      %150 = arith.index_cast %18 : i32 to index
      %c0_78 = arith.constant 0 : index
      %c0_79 = arith.constant 0 : index
      %151 = vector.load %arg7[%150, %c0_78, %c0_79] : memref<2x8x256xf32, #tpu.memory_space<vmem>>, vector<1x8x256xf32>
      %152 = vector.shape_cast %151 : vector<1x8x256xf32> to vector<8x256xf32>
      %153 = vector.shape_cast %149 : vector<8x256xf32> to vector<1x8x256xf32>
      tpu.vector_store %arg7[%150, %c0_78, %c0_79], %153 {strides = array<i32>} : memref<2x8x256xf32, #tpu.memory_space<vmem>>, vector<1x8x256xf32>,
    }
    %c2_i32_9 = arith.constant 2 : i32
    return
  }
  func.func @transform_0(%arg0: i32) -> (i32, i32) {
    %c0_i32 = arith.constant 0 : i32
    %c0_i32_0 = arith.constant 0 : i32
    %c0_i32_1 = arith.constant 0 : i32
    return %c0_i32, %c0_i32_0 : i32, i32
  }
  func.func @transform_1(%arg0: i32) -> (i32, i32, i32) {
    %c0_i32 = arith.constant 0 : i32
    %c0_i32_0 = arith.constant 0 : i32
    %c0_i32_1 = arith.constant 0 : i32
    return %arg0, %c0_i32, %c0_i32_0 : i32, i32, i32
  }
  func.func @transform_2(%arg0: i32) -> (i32, i32) {
    %c0_i32 = arith.constant 0 : i32
    %c0_i32_0 = arith.constant 0 : i32
    %c0_i32_1 = arith.constant 0 : i32
    return %c0_i32, %c0_i32_0 : i32, i32
  }
  func.func @transform_3(%arg0: i32) -> (i32, i32) {
    %c0_i32 = arith.constant 0 : i32
    %c0_i32_0 = arith.constant 0 : i32
    %c0_i32_1 = arith.constant 0 : i32
    return %c0_i32, %c0_i32_0 : i32, i32
  }
  func.func @transform_4(%arg0: i32) -> (i32, i32) {
    %c0_i32 = arith.constant 0 : i32
    %c0_i32_0 = arith.constant 0 : i32
    %c0_i32_1 = arith.constant 0 : i32
    return %c0_i32, %c0_i32_0 : i32, i32
  }
  func.func @transform_5(%arg0: i32) -> (i32, i32) {
    %c0_i32 = arith.constant 0 : i32
    %c0_i32_0 = arith.constant 0 : i32
    %c0_i32_1 = arith.constant 0 : i32
    return %c0_i32, %c0_i32_0 : i32, i32
  }
  func.func @transform_6(%arg0: i32) -> (i32, i32, i32) {
    %c0_i32 = arith.constant 0 : i32
    %c0_i32_0 = arith.constant 0 : i32
    %c0_i32_1 = arith.constant 0 : i32
    return %arg0, %c0_i32, %c0_i32_0 : i32, i32, i32
  }
}

</mosaic_0001>

<llo_original>
// kernel: tpu_custom_call.1
$region0: #{tpu_custom_call.1}
  #allocation0 [shape = 'u32[]', space=smem, size = 0x4, offset = 0x4, fixed_abs, tag = 'smem constant byte address 0x4 - core index']
  #allocation1 [shape = 'u32[144,128]{1,0:T(1,128)}', space=vmem, size = 0x12000, scoped, tag = 'internal scratch']
  #allocation2 [shape = 'f32[72,256]{1,0:T(8,128)}', space=vmem, size = 0x12000, scoped, tag = 'scratch operand']
  %s0 = inlined_call_operand.hbm [shape: s32[2,256], index: 0, kind: input, shape index: {}]
  %s1 = inlined_call_operand.hbm [shape: f32[2,8,256], index: 1, kind: input, shape index: {}]
  %s2 = inlined_call_operand.vmem [shape: f32[8,72], index: 2, kind: input, shape index: {}]
  %s3 = inlined_call_operand.vmem [shape: f32[8,1], index: 3, kind: input, shape index: {}]
  %s4 = inlined_call_operand.vmem [shape: f32[8,72], index: 4, kind: input, shape index: {}]
  %s5 = inlined_call_operand.vmem [shape: f32[8,1], index: 5, kind: input, shape index: {}]
  %s6 = inlined_call_operand.hbm [shape: f32[2,8,256], index: 6, kind: output, shape index: {}]
  %s7 = sld [smem:[#allocation0]]
  $region49: #{tpu_custom_call.1} parent=0
    _
  %s9 = ssub.s32 1, %s7
  %s10 = scalar_select 0, %s9, %s7
  $region1: #{tpu_custom_call.1} parent=0
    #allocation3 [shape = 'u8[2048]{0}', space=vmem, size = 0x800, scoped, tag = 'input window, operand 0, single buffered']
    #allocation4 [shape = 's32[1]{0}', space=sflag, size = 0x4, scoped, tag = 'scoped memory for tpu_custom_call.1']
    #allocation5 [shape = 's32[1]{0}', space=sflag, size = 0x4, scoped, tag = 'scoped memory for tpu_custom_call.1']
    #allocation6 [shape = 'u8[16384]{0}', space=vmem, size = 0x4000, scoped, tag = 'input window, operand 1, single buffered']
    #allocation7 [shape = 's32[1]{0}', space=sflag, size = 0x4, scoped, tag = 'scoped memory for tpu_custom_call.1']
    #allocation8 [shape = 'u8[16384]{0}', space=vmem, size = 0x4000, scoped, tag = 'output window, operand 0, single buffered']
    %11 = vsyncpa [#allocation4], 0
    %12 = vsyncpa [#allocation7], 0
    %13 = vsyncpa [#allocation5], 0
    // Predicated region
    $region2: #{tpu_custom_call.1} parent=1 // pred_check
      _
    $region3: #{tpu_custom_call.1} parent=1 // pred_check_branch
      %15 = sbr.rel (0) target = $region5
    $region4: #{tpu_custom_call.1} parent=1 // pred_region
      %s17 = ssub.s32 64, 64
      %18 = vsyncadd [#allocation4], %s17
      %s20 = sshll.u32 [#allocation3], 4
      %s21 = int_to_ptr.vmem [resolvable:$true] %s20
      %23 = dma.hbm_to_vmem [thread:$0]  %s0, 64, %s21, [#allocation4]
    $region5: #{tpu_custom_call.1} parent=1 // pred_fallthru
      _
    // Predicated region
    $region6: #{tpu_custom_call.1} parent=1 // pred_check
      _
    $region7: #{tpu_custom_call.1} parent=1 // pred_check_branch
      %25 = sbr.rel (0) target = $region9
    $region8: #{tpu_custom_call.1} parent=1 // pred_region
      %s27 = ssub.s32 512, 512
      %28 = vsyncadd [#allocation7], %s27
      %s29 = sshll.u32 [#allocation6], 4
      %s30 = int_to_ptr.vmem [resolvable:$true] %s29
      %35 = dma.hbm_to_vmem [thread:$0]  %s1, 512, %s30, [#allocation7], 256, 256, 16
    $region9: #{tpu_custom_call.1} parent=1 // pred_fallthru
      _
    // Predicated region
    $region10: #{tpu_custom_call.1} parent=1 // pred_check
      _
    $region11: #{tpu_custom_call.1} parent=1 // pred_check_branch
      %37 = sbr.rel (0) target = $region13
    $region12: #{tpu_custom_call.1} parent=1 // pred_region
      _
    $region13: #{tpu_custom_call.1} parent=1 // pred_fallthru
      _
    // Predicated region
    $region14: #{tpu_custom_call.1} parent=1 // pred_check
      _
    $region15: #{tpu_custom_call.1} parent=1 // pred_check_branch
      %39 = sbr.rel (0) target = $region17
    $region16: #{tpu_custom_call.1} parent=1 // pred_region
      _
    $region17: #{tpu_custom_call.1} parent=1 // pred_fallthru
      _
    // Predicated region
    $region18: #{tpu_custom_call.1} parent=1 // pred_check
      _
    $region19: #{tpu_custom_call.1} parent=1 // pred_check_branch
      %41 = sbr.rel (0) target = $region21
    $region20: #{tpu_custom_call.1} parent=1 // pred_region
      _
    $region21: #{tpu_custom_call.1} parent=1 // pred_fallthru
      _
    // Predicated region
    $region22: #{tpu_custom_call.1} parent=1 // pred_check
      _
    $region23: #{tpu_custom_call.1} parent=1 // pred_check_branch
      %43 = sbr.rel (0) target = $region25
    $region24: #{tpu_custom_call.1} parent=1 // pred_region
      _
    $region25: #{tpu_custom_call.1} parent=1 // pred_fallthru
      _
    // Predicated region
    $region26: #{tpu_custom_call.1} parent=1 // pred_check
      _
    $region27: #{tpu_custom_call.1} parent=1 // pred_check_branch
      %45 = sbr.rel (0) target = $region29
    $region28: #{tpu_custom_call.1} parent=1 // pred_region
      %46 = dma.done [#allocation4], 64
    $region29: #{tpu_custom_call.1} parent=1 // pred_fallthru
      _
    // Predicated region
    $region30: #{tpu_custom_call.1} parent=1 // pred_check
      _
    $region31: #{tpu_custom_call.1} parent=1 // pred_check_branch
      %48 = sbr.rel (0) target = $region33
    $region32: #{tpu_custom_call.1} parent=1 // pred_region
      %49 = dma.done [#allocation7], 512
    $region33: #{tpu_custom_call.1} parent=1 // pred_fallthru
      _
    %v50 = vld [vmem:[#allocation3] ss:$2 sm:$0x3]
    %s51 = scalar_lea.vmem [#allocation3], 1
    %v52 = vld [vmem:[%s51] ss:$2 sm:$0x3]
    %vm53 = vcmp.ge.s32.totalorder %v50, 1
    %vm54 = vcmp.le.s32.totalorder %v50, 14
    %vm55 = vcmp.ge.s32.totalorder %v52, 1
    %vm56 = vcmp.le.s32.totalorder %v52, 14
    %vm57 = vmand %vm53, %vm55
    %vm58 = vmand %vm53, %vm56
    %vm59 = vmand %vm54, %vm55
    %vm60 = vmand %vm54, %vm56
    %v61 = vld [vmem:[%s3] sm:$0xff]
    %v62 = vld [vmem:[%s5] sm:$0xff]
    loop: start=0, step=1, limit=2
    $region34: #{tpu_custom_call.1} parent=1 // loop_pre_header
      _
    $region35: #{tpu_custom_call.1} parent=1 // loop_header
      %s64 = sphi 0, %s68
      %p65 = scmp.ge.s32.totalorder %s64, 2
    $region36: #{tpu_custom_call.1} parent=1 // loop_header_branch
      %67 = sbr.rel (%p65) target = $region40
    $region37: #{tpu_custom_call.1} parent=1 // loop_body
      %s69 = smul.u32 %s64, 2
      %s70 = smul.addr %s69, 8
      %s71 = scalar_lea.vmem [#allocation6], %s70
      %v72 = vld [vmem:[%s71] sm:$0xff]
      %v73 = vld [vmem:[%s71 + $0x8] sm:$0xff]
      %74 = vrot.lane.b32.xlu0 %v72, 17
      %v75 = vpop.permute.xlu0 %74
      %76 = vrot.lane.b32.xlu0 %v73, 17
      %v77 = vpop.permute.xlu0 %76
      %v78 = vlaneseq
      %v79 = vand.u32 %v78, 127
      %vm80 = vcmp.lt.s32.totalorder %v79, 17
      %v81 = vsel %vm80, %v75, %v77
      %v82 = vsel %vm80, %v77, %v75
      %v83 = vsel %vm57, 1, 0
      %v84 = vlaneseq
      %v85 = vshrl.u32 %v84, 7
      %v86 = vsub.s32 0, %v85
      %v87 = vrot.slane %v83, %v86
      %v88 = vlaneseq
      %v89 = vshrl.u32 %v88, 7
      %v90 = vsub.s32 1, %v89
      %v91 = vrot.slane %v83, %v90
      %vm92 = vcmp.eq.s32.totalorder %v87, 1
      %vm93 = vcmp.eq.s32.totalorder %v91, 1
      %v94 = vsel %vm92, %v82, 0.0
      %v95 = vsel %vm93, %v81, 0.0
      %96 = vst [vmem:[#allocation2] sm:$0xff] %v94
      %97 = vst [vmem:[#allocation2 + $0x8] sm:$0xff] %v95
      %98 = vrot.lane.b32.xlu0 %v72, 16
      %v99 = vpop.permute.xlu0 %98
      %100 = vrot.lane.b32.xlu0 %v73, 16
      %v101 = vpop.permute.xlu0 %100
      %vm102 = vcmp.lt.s32.totalorder %v79, 16
      %v103 = vsel %vm102, %v99, %v101
      %v104 = vsel %vm102, %v101, %v99
      %v105 = vsel %vm53, 1, 0
      %v106 = vlaneseq
      %v107 = vshrl.u32 %v106, 7
      %v108 = vsub.s32 0, %v107
      %v109 = vrot.slane %v105, %v108
      %v110 = vlaneseq
      %v111 = vshrl.u32 %v110, 7
      %v112 = vsub.s32 1, %v111
      %v113 = vrot.slane %v105, %v112
      %vm114 = vcmp.eq.s32.totalorder %v109, 1
      %vm115 = vcmp.eq.s32.totalorder %v113, 1
      %v116 = vsel %vm114, %v104, 0.0
      %v117 = vsel %vm115, %v103, 0.0
      %118 = vst [vmem:[#allocation2 + $0x10] sm:$0xff] %v116
      %119 = vst [vmem:[#allocation2 + $0x18] sm:$0xff] %v117
      %120 = vrot.lane.b32.xlu0 %v72, 15
      %v121 = vpop.permute.xlu0 %120
      %122 = vrot.lane.b32.xlu0 %v73, 15
      %v123 = vpop.permute.xlu0 %122
      %vm124 = vcmp.lt.s32.totalorder %v79, 15
      %v125 = vsel %vm124, %v121, %v123
      %v126 = vsel %vm124, %v123, %v121
      %v127 = vsel %vm58, 1, 0
      %v128 = vlaneseq
      %v129 = vshrl.u32 %v128, 7
      %v130 = vsub.s32 0, %v129
      %v131 = vrot.slane %v127, %v130
      %v132 = vlaneseq
      %v133 = vshrl.u32 %v132, 7
      %v134 = vsub.s32 1, %v133
      %v135 = vrot.slane %v127, %v134
      %vm136 = vcmp.eq.s32.totalorder %v131, 1
      %vm137 = vcmp.eq.s32.totalorder %v135, 1
      %v138 = vsel %vm136, %v126, 0.0
      %v139 = vsel %vm137, %v125, 0.0
      %140 = vst [vmem:[#allocation2 + $0x20] sm:$0xff] %v138
      %141 = vst [vmem:[#allocation2 + $0x28] sm:$0xff] %v139
      %142 = vrot.lane.b32.xlu0 %v72, 1
      %v143 = vpop.permute.xlu0 %142
      %144 = vrot.lane.b32.xlu0 %v73, 1
      %v145 = vpop.permute.xlu0 %144
      %vm146 = vcmp.lt.s32.totalorder %v79, 1
      %v147 = vsel %vm146, %v143, %v145
      %v148 = vsel %vm146, %v145, %v143
      %v149 = vsel %vm55, 1, 0
      %v150 = vlaneseq
      %v151 = vshrl.u32 %v150, 7
      %v152 = vsub.s32 0, %v151
      %v153 = vrot.slane %v149, %v152
      %v154 = vlaneseq
      %v155 = vshrl.u32 %v154, 7
      %v156 = vsub.s32 1, %v155
      %v157 = vrot.slane %v149, %v156
      %vm158 = vcmp.eq.s32.totalorder %v153, 1
      %vm159 = vcmp.eq.s32.totalorder %v157, 1
      %v160 = vsel %vm158, %v148, 0.0
      %v161 = vsel %vm159, %v147, 0.0
      %162 = vst [vmem:[#allocation2 + $0x30] sm:$0xff] %v160
      %163 = vst [vmem:[#allocation2 + $0x38] sm:$0xff] %v161
      %164 = vst [vmem:[#allocation2 + $0x40] sm:$0xff] %v72
      %165 = vst [vmem:[#allocation2 + $0x48] sm:$0xff] %v73
      %166 = vrot.lane.b32.xlu0 %v72, 127
      %v167 = vpop.permute.xlu0 %166
      %168 = vrot.lane.b32.xlu0 %v73, 127
      %v169 = vpop.permute.xlu0 %168
      %vm170 = vcmp.lt.s32.totalorder %v79, 127
      %v171 = vsel %vm170, %v167, %v169
      %v172 = vsel %vm170, %v169, %v167
      %v173 = vsel %vm56, 1, 0
      %v174 = vlaneseq
      %v175 = vshrl.u32 %v174, 7
      %v176 = vsub.s32 0, %v175
      %v177 = vrot.slane %v173, %v176
      %v178 = vlaneseq
      %v179 = vshrl.u32 %v178, 7
      %v180 = vsub.s32 1, %v179
      %v181 = vrot.slane %v173, %v180
      %vm182 = vcmp.eq.s32.totalorder %v177, 1
      %vm183 = vcmp.eq.s32.totalorder %v181, 1
      %v184 = vsel %vm182, %v171, 0.0
      %v185 = vsel %vm183, %v172, 0.0
      %186 = vst [vmem:[#allocation2 + $0x50] sm:$0xff] %v184
      %187 = vst [vmem:[#allocation2 + $0x58] sm:$0xff] %v185
      %188 = vrot.lane.b32.xlu0 %v72, 113
      %v189 = vpop.permute.xlu0 %188
      %190 = vrot.lane.b32.xlu0 %v73, 113
      %v191 = vpop.permute.xlu0 %190
      %vm192 = vcmp.lt.s32.totalorder %v79, 113
      %v193 = vsel %vm192, %v189, %v191
      %v194 = vsel %vm192, %v191, %v189
      %v195 = vsel %vm59, 1, 0
      %v196 = vlaneseq
      %v197 = vshrl.u32 %v196, 7
      %v198 = vsub.s32 0, %v197
      %v199 = vrot.slane %v195, %v198
      %v200 = vlaneseq
      %v201 = vshrl.u32 %v200, 7
      %v202 = vsub.s32 1, %v201
      %v203 = vrot.slane %v195, %v202
      %vm204 = vcmp.eq.s32.totalorder %v199, 1
      %vm205 = vcmp.eq.s32.totalorder %v203, 1
      %v206 = vsel %vm204, %v193, 0.0
      %v207 = vsel %vm205, %v194, 0.0
      %208 = vst [vmem:[#allocation2 + $0x60] sm:$0xff] %v206
      %209 = vst [vmem:[#allocation2 + $0x68] sm:$0xff] %v207
      %210 = vrot.lane.b32.xlu0 %v72, 112
      %v211 = vpop.permute.xlu0 %210
      %212 = vrot.lane.b32.xlu0 %v73, 112
      %v213 = vpop.permute.xlu0 %212
      %vm214 = vcmp.lt.s32.totalorder %v79, 112
      %v215 = vsel %vm214, %v211, %v213
      %v216 = vsel %vm214, %v213, %v211
      %v217 = vsel %vm54, 1, 0
      %v218 = vlaneseq
      %v219 = vshrl.u32 %v218, 7
      %v220 = vsub.s32 0, %v219
      %v221 = vrot.slane %v217, %v220
      %v222 = vlaneseq
      %v223 = vshrl.u32 %v222, 7
      %v224 = vsub.s32 1, %v223
      %v225 = vrot.slane %v217, %v224
      %vm226 = vcmp.eq.s32.totalorder %v221, 1
      %vm227 = vcmp.eq.s32.totalorder %v225, 1
      %v228 = vsel %vm226, %v215, 0.0
      %v229 = vsel %vm227, %v216, 0.0
      %230 = vst [vmem:[#allocation2 + $0x70] sm:$0xff] %v228
      %231 = vst [vmem:[#allocation2 + $0x78] sm:$0xff] %v229
      %232 = vrot.lane.b32.xlu0 %v72, 111
      %v233 = vpop.permute.xlu0 %232
      %234 = vrot.lane.b32.xlu0 %v73, 111
      %v235 = vpop.permute.xlu0 %234
      %vm236 = vcmp.lt.s32.totalorder %v79, 111
      %v237 = vsel %vm236, %v233, %v235
      %v238 = vsel %vm236, %v235, %v233
      %v239 = vsel %vm60, 1, 0
      %v240 = vlaneseq
      %v241 = vshrl.u32 %v240, 7
      %v242 = vsub.s32 0, %v241
      %v243 = vrot.slane %v239, %v242
      %v244 = vlaneseq
      %v245 = vshrl.u32 %v244, 7
      %v246 = vsub.s32 1, %v245
      %v247 = vrot.slane %v239, %v246
      %vm248 = vcmp.eq.s32.totalorder %v243, 1
      %vm249 = vcmp.eq.s32.totalorder %v247, 1
      %v250 = vsel %vm248, %v237, 0.0
      %v251 = vsel %vm249, %v238, 0.0
      %252 = vst [vmem:[#allocation2 + $0x80] sm:$0xff] %v250
      %253 = vst [vmem:[#allocation2 + $0x88] sm:$0xff] %v251
      %v254 = vld [vmem:[%s2] sm:$0xff]
      %v255 = vld [vmem:[#allocation2] sm:$0xff]
      %v256 = vld [vmem:[#allocation2 + $0x8] sm:$0xff]
      %v257 = vld [vmem:[#allocation2 + $0x10] sm:$0xff]
      %v258 = vld [vmem:[#allocation2 + $0x18] sm:$0xff]
      %v259 = vld [vmem:[#allocation2 + $0x20] sm:$0xff]
      %v260 = vld [vmem:[#allocation2 + $0x28] sm:$0xff]
      %v261 = vld [vmem:[#allocation2 + $0x30] sm:$0xff]
      %v262 = vld [vmem:[#allocation2 + $0x38] sm:$0xff]
      %v263 = vld [vmem:[#allocation2 + $0x40] sm:$0xff]
      %v264 = vld [vmem:[#allocation2 + $0x48] sm:$0xff]
      %v265 = vld [vmem:[#allocation2 + $0x50] sm:$0xff]
      %v266 = vld [vmem:[#allocation2 + $0x58] sm:$0xff]
      %v267 = vld [vmem:[#allocation2 + $0x60] sm:$0xff]
      %v268 = vld [vmem:[#allocation2 + $0x68] sm:$0xff]
      %v269 = vld [vmem:[#allocation2 + $0x70] sm:$0xff]
      %v270 = vld [vmem:[#allocation2 + $0x78] sm:$0xff]
      %v271 = vld [vmem:[#allocation2 + $0x80] sm:$0xff]
      %v272 = vld [vmem:[#allocation2 + $0x88] sm:$0xff]
      %274 = vset.pattern.permute.xlu0 0
      %275 = vperm.xlu0 %274, %v61
      %v276 = vpop.permute.xlu0 %275
      %vm278 = vcmask 588800
      %v280 = vsel %vm278, %v254, 0
      %282 = vmatprep.subr.mxu0 %v256
      %283 = vmatpush1.msra.mxu0 %v255
      %284 = vmatprep.subr.mxu0 %v258
      %285 = vmatpush1.msra.mxu0 %v257
      %286 = vmatprep.subr.mxu0 %v260
      %287 = vmatpush1.msra.mxu0 %v259
      %288 = vmatprep.subr.mxu0 %v262
      %289 = vmatpush1.msra.mxu0 %v261
      %290 = vmatprep.subr.mxu0 %v264
      %291 = vmatpush1.msra.mxu0 %v263
      %292 = vmatprep.subr.mxu0 %v266
      %293 = vmatpush1.msra.mxu0 %v265
      %294 = vmatprep.subr.mxu0 %v268
      %295 = vmatpush1.msra.mxu0 %v267
      %296 = vmatprep.subr.mxu0 %v270
      %297 = vmatpush1.msra.mxu0 %v269
      %298 = vmatprep.subr.mxu0 %v272
      %299 = vmatpush1.msra.mxu0 %v271
      %300 = vmatprep.subr.mxu0 0.0
      %301 = vmatpush1.msra.mxu0 0.0
      %302 = vmatprep.subr.mxu0 0.0
      %303 = vmatpush1.msra.mxu0 0.0
      %304 = vmatprep.subr.mxu0 0.0
      %305 = vmatpush1.msra.mxu0 0.0
      %306 = vmatprep.subr.mxu0 0.0
      %307 = vmatpush1.msra.mxu0 0.0
      %308 = vmatprep.subr.mxu0 0.0
      %309 = vmatpush1.msra.mxu0 0.0
      %310 = vmatprep.subr.mxu0 0.0
      %311 = vmatpush1.msra.mxu0 0.0
      %312 = vmatprep.subr.mxu0 0.0
      %313 = vmatpush1.msra.mxu0 0.0
      %314 = vmatprep.subr.mxu0 0.0
      %315 = vmatpush1.msra.mxu0 0.0
      %316 = vmatprep.subr.mxu0 0.0
      %317 = vmatpush1.msra.mxu0 0.0
      %318 = vmatprep.subr.mxu0 0.0
      %319 = vmatpush1.msra.mxu0 0.0
      %320 = vmatprep.subr.mxu0 0.0
      %321 = vmatpush1.msra.mxu0 0.0
      %322 = vmatprep.subr.mxu0 0.0
      %323 = vmatpush1.msra.mxu0 0.0
      %324 = vmatprep.subr.mxu0 0.0
      %325 = vmatpush1.msra.mxu0 0.0
      %326 = vmatprep.subr.mxu0 0.0
      %327 = vmatpush1.msra.mxu0 0.0
      %328 = vmatprep.subr.mxu0 0.0
      %329 = vmatpush1.msra.mxu0 0.0
      %330 = vmatprep.subr.mxu0 0.0
      %331 = vmatpush1.msra.mxu0 0.0
      %332 = vmatprep.subr.mxu0 0.0
      %333 = vmatpush1.msra.mxu0 0.0
      %334 = vmatprep.subr.mxu0 0.0
      %335 = vmatpush1.msra.mxu0 0.0
      %336 = vmatprep.subr.mxu0 0.0
      %337 = vmatpush1.msra.mxu0 0.0
      %338 = vmatprep.subr.mxu0 0.0
      %339 = vmatpush1.msra.mxu0 0.0
      %340 = vmatprep.subr.mxu0 0.0
      %341 = vmatpush1.msra.mxu0 0.0
      %342 = vmatprep.subr.mxu0 0.0
      %343 = vmatpush1.msra.mxu0 0.0
      %344 = vmatprep.subr.mxu0 0.0
      %345 = vmatpush1.msra.mxu0 0.0
      %346 = vmatprep.mubr.f32.mxu0 0.0
      %347 = vmatmul.mubr.f32.gmra.mrb[0].mxu0 %v280
      %v348 = vpop.f32.mrb[0].mxu0
      %v349 = vadd.f32 %v276, %v348
      %v350 = vpop.f32.mrb[0].mxu0
      %v351 = vadd.f32 %v276, %v350
      %352 = vdwg.mxu0
      %v353 = vmax.f32 %v349, 0.0
      %v354 = vmax.f32 %v351, 0.0
      %355 = vrot.lane.b32.xlu0 %v353, 17
      %v356 = vpop.permute.xlu0 %355
      %357 = vrot.lane.b32.xlu0 %v354, 17
      %v358 = vpop.permute.xlu0 %357
      %v359 = vsel %vm80, %v356, %v358
      %v360 = vsel %vm80, %v358, %v356
      %v361 = vsel %vm92, %v360, 0.0
      %v362 = vsel %vm93, %v359, 0.0
      %363 = vst [vmem:[#allocation2] sm:$0xff] %v361
      %364 = vst [vmem:[#allocation2 + $0x8] sm:$0xff] %v362
      %365 = vrot.lane.b32.xlu0 %v353, 16
      %v366 = vpop.permute.xlu0 %365
      %367 = vrot.lane.b32.xlu0 %v354, 16
      %v368 = vpop.permute.xlu0 %367
      %v369 = vsel %vm102, %v366, %v368
      %v370 = vsel %vm102, %v368, %v366
      %v371 = vsel %vm114, %v370, 0.0
      %v372 = vsel %vm115, %v369, 0.0
      %373 = vst [vmem:[#allocation2 + $0x10] sm:$0xff] %v371
      %374 = vst [vmem:[#allocation2 + $0x18] sm:$0xff] %v372
      %375 = vrot.lane.b32.xlu0 %v353, 15
      %v376 = vpop.permute.xlu0 %375
      %377 = vrot.lane.b32.xlu0 %v354, 15
      %v378 = vpop.permute.xlu0 %377
      %v379 = vsel %vm124, %v376, %v378
      %v380 = vsel %vm124, %v378, %v376
      %v381 = vsel %vm136, %v380, 0.0
      %v382 = vsel %vm137, %v379, 0.0
      %383 = vst [vmem:[#allocation2 + $0x20] sm:$0xff] %v381
      %384 = vst [vmem:[#allocation2 + $0x28] sm:$0xff] %v382
      %385 = vrot.lane.b32.xlu0 %v353, 1
      %v386 = vpop.permute.xlu0 %385
      %387 = vrot.lane.b32.xlu0 %v354, 1
      %v388 = vpop.permute.xlu0 %387
      %v389 = vsel %vm146, %v386, %v388
      %v390 = vsel %vm146, %v388, %v386
      %v391 = vsel %vm158, %v390, 0.0
      %v392 = vsel %vm159, %v389, 0.0
      %393 = vst [vmem:[#allocation2 + $0x30] sm:$0xff] %v391
      %394 = vst [vmem:[#allocation2 + $0x38] sm:$0xff] %v392
      %395 = vst [vmem:[#allocation2 + $0x40] sm:$0xff] %v353
      %396 = vst [vmem:[#allocation2 + $0x48] sm:$0xff] %v354
      %397 = vrot.lane.b32.xlu0 %v353, 127
      %v398 = vpop.permute.xlu0 %397
      %399 = vrot.lane.b32.xlu0 %v354, 127
      %v400 = vpop.permute.xlu0 %399
      %v401 = vsel %vm170, %v398, %v400
      %v402 = vsel %vm170, %v400, %v398
      %v403 = vsel %vm182, %v401, 0.0
      %v404 = vsel %vm183, %v402, 0.0
      %405 = vst [vmem:[#allocation2 + $0x50] sm:$0xff] %v403
      %406 = vst [vmem:[#allocation2 + $0x58] sm:$0xff] %v404
      %407 = vrot.lane.b32.xlu0 %v353, 113
      %v408 = vpop.permute.xlu0 %407
      %409 = vrot.lane.b32.xlu0 %v354, 113
      %v410 = vpop.permute.xlu0 %409
      %v411 = vsel %vm192, %v408, %v410
      %v412 = vsel %vm192, %v410, %v408
      %v413 = vsel %vm204, %v411, 0.0
      %v414 = vsel %vm205, %v412, 0.0
      %415 = vst [vmem:[#allocation2 + $0x60] sm:$0xff] %v413
      %416 = vst [vmem:[#allocation2 + $0x68] sm:$0xff] %v414
      %417 = vrot.lane.b32.xlu0 %v353, 112
      %v418 = vpop.permute.xlu0 %417
      %419 = vrot.lane.b32.xlu0 %v354, 112
      %v420 = vpop.permute.xlu0 %419
      %v421 = vsel %vm214, %v418, %v420
      %v422 = vsel %vm214, %v420, %v418
      %v423 = vsel %vm226, %v421, 0.0
      %v424 = vsel %vm227, %v422, 0.0
      %425 = vst [vmem:[#allocation2 + $0x70] sm:$0xff] %v423
      %426 = vst [vmem:[#allocation2 + $0x78] sm:$0xff] %v424
      %427 = vrot.lane.b32.xlu0 %v353, 111
      %v428 = vpop.permute.xlu0 %427
      %429 = vrot.lane.b32.xlu0 %v354, 111
      %v430 = vpop.permute.xlu0 %429
      %v431 = vsel %vm236, %v428, %v430
      %v432 = vsel %vm236, %v430, %v428
      %v433 = vsel %vm248, %v431, 0.0
      %v434 = vsel %vm249, %v432, 0.0
      %435 = vst [vmem:[#allocation2 + $0x80] sm:$0xff] %v433
      %436 = vst [vmem:[#allocation2 + $0x88] sm:$0xff] %v434
      %v437 = vld [vmem:[%s4] sm:$0xff]
      %v438 = vld [vmem:[#allocation2] sm:$0xff]
      %v439 = vld [vmem:[#allocation2 + $0x8] sm:$0xff]
      %v440 = vld [vmem:[#allocation2 + $0x10] sm:$0xff]
      %v441 = vld [vmem:[#allocation2 + $0x18] sm:$0xff]
      %v442 = vld [vmem:[#allocation2 + $0x20] sm:$0xff]
      %v443 = vld [vmem:[#allocation2 + $0x28] sm:$0xff]
      %v444 = vld [vmem:[#allocation2 + $0x30] sm:$0xff]
      %v445 = vld [vmem:[#allocation2 + $0x38] sm:$0xff]
      %v446 = vld [vmem:[#allocation2 + $0x40] sm:$0xff]
      %v447 = vld [vmem:[#allocation2 + $0x48] sm:$0xff]
      %v448 = vld [vmem:[#allocation2 + $0x50] sm:$0xff]
      %v449 = vld [vmem:[#allocation2 + $0x58] sm:$0xff]
      %v450 = vld [vmem:[#allocation2 + $0x60] sm:$0xff]
      %v451 = vld [vmem:[#allocation2 + $0x68] sm:$0xff]
      %v452 = vld [vmem:[#allocation2 + $0x70] sm:$0xff]
      %v453 = vld [vmem:[#allocation2 + $0x78] sm:$0xff]
      %v454 = vld [vmem:[#allocation2 + $0x80] sm:$0xff]
      %v455 = vld [vmem:[#allocation2 + $0x88] sm:$0xff]
      %457 = vset.pattern.permute.xlu0 0
      %458 = vperm.xlu0 %457, %v62
      %v459 = vpop.permute.xlu0 %458
      %v462 = vsel %vm278, %v437, 0
      %464 = vmatprep.subr.mxu0 %v439
      %465 = vmatpush1.msra.mxu0 %v438
      %466 = vmatprep.subr.mxu0 %v441
      %467 = vmatpush1.msra.mxu0 %v440
      %468 = vmatprep.subr.mxu0 %v443
      %469 = vmatpush1.msra.mxu0 %v442
      %470 = vmatprep.subr.mxu0 %v445
      %471 = vmatpush1.msra.mxu0 %v444
      %472 = vmatprep.subr.mxu0 %v447
      %473 = vmatpush1.msra.mxu0 %v446
      %474 = vmatprep.subr.mxu0 %v449
      %475 = vmatpush1.msra.mxu0 %v448
      %476 = vmatprep.subr.mxu0 %v451
      %477 = vmatpush1.msra.mxu0 %v450
      %478 = vmatprep.subr.mxu0 %v453
      %479 = vmatpush1.msra.mxu0 %v452
      %480 = vmatprep.subr.mxu0 %v455
      %481 = vmatpush1.msra.mxu0 %v454
      %482 = vmatprep.subr.mxu0 0.0
      %483 = vmatpush1.msra.mxu0 0.0
      %484 = vmatprep.subr.mxu0 0.0
      %485 = vmatpush1.msra.mxu0 0.0
      %486 = vmatprep.subr.mxu0 0.0
      %487 = vmatpush1.msra.mxu0 0.0
      %488 = vmatprep.subr.mxu0 0.0
      %489 = vmatpush1.msra.mxu0 0.0
      %490 = vmatprep.subr.mxu0 0.0
      %491 = vmatpush1.msra.mxu0 0.0
      %492 = vmatprep.subr.mxu0 0.0
      %493 = vmatpush1.msra.mxu0 0.0
      %494 = vmatprep.subr.mxu0 0.0
      %495 = vmatpush1.msra.mxu0 0.0
      %496 = vmatprep.subr.mxu0 0.0
      %497 = vmatpush1.msra.mxu0 0.0
      %498 = vmatprep.subr.mxu0 0.0
      %499 = vmatpush1.msra.mxu0 0.0
      %500 = vmatprep.subr.mxu0 0.0
      %501 = vmatpush1.msra.mxu0 0.0
      %502 = vmatprep.subr.mxu0 0.0
      %503 = vmatpush1.msra.mxu0 0.0
      %504 = vmatprep.subr.mxu0 0.0
      %505 = vmatpush1.msra.mxu0 0.0
      %506 = vmatprep.subr.mxu0 0.0
      %507 = vmatpush1.msra.mxu0 0.0
      %508 = vmatprep.subr.mxu0 0.0
      %509 = vmatpush1.msra.mxu0 0.0
      %510 = vmatprep.subr.mxu0 0.0
      %511 = vmatpush1.msra.mxu0 0.0
      %512 = vmatprep.subr.mxu0 0.0
      %513 = vmatpush1.msra.mxu0 0.0
      %514 = vmatprep.subr.mxu0 0.0
      %515 = vmatpush1.msra.mxu0 0.0
      %516 = vmatprep.subr.mxu0 0.0
      %517 = vmatpush1.msra.mxu0 0.0
      %518 = vmatprep.subr.mxu0 0.0
      %519 = vmatpush1.msra.mxu0 0.0
      %520 = vmatprep.subr.mxu0 0.0
      %521 = vmatpush1.msra.mxu0 0.0
      %522 = vmatprep.subr.mxu0 0.0
      %523 = vmatpush1.msra.mxu0 0.0
      %524 = vmatprep.subr.mxu0 0.0
      %525 = vmatpush1.msra.mxu0 0.0
      %526 = vmatprep.subr.mxu0 0.0
      %527 = vmatpush1.msra.mxu0 0.0
      %528 = vmatprep.mubr.f32.mxu0 0.0
      %529 = vmatmul.mubr.f32.gmra.mrb[0].mxu0 %v462
      %v530 = vpop.f32.mrb[0].mxu0
      %v531 = vadd.f32 %v459, %v530
      %v532 = vpop.f32.mrb[0].mxu0
      %v533 = vadd.f32 %v459, %v532
      %534 = vdwg.mxu0
      %v535 = vmax.f32 %v531, 0.0
      %v536 = vmax.f32 %v533, 0.0
      %s537 = smul.addr %s69, 8
      %s538 = scalar_lea.vmem [#allocation8], %s537
      %539 = vst [vmem:[%s538] sm:$0xff] %v535
      %540 = vst [vmem:[%s538 + $0x8] sm:$0xff] %v536
    $region38: #{tpu_custom_call.1} parent=1 // loop_footer
      %s68 = sadd.s32 1, %s64
    $region39: #{tpu_custom_call.1} parent=1 // loop_footer_branch
      %63 = sbr.rel target = $region35
    $region40: #{tpu_custom_call.1} parent=1 // loop_exit
      _
    // Predicated region
    $region41: #{tpu_custom_call.1} parent=1 // pred_check
      _
    $region42: #{tpu_custom_call.1} parent=1 // pred_check_branch
      %542 = sbr.rel (0) target = $region44
    $region43: #{tpu_custom_call.1} parent=1 // pred_region
      %s544 = ssub.s32 512, 512
      %545 = vsyncadd [#allocation5], %s544
      %s546 = sshll.u32 [#allocation8], 4
      %s547 = int_to_ptr.vmem [resolvable:$true] %s546
      %552 = dma.vmem_to_hbm [thread:$0]  %s547, 512, %s6, [#allocation5], 256, 256, 16
    $region44: #{tpu_custom_call.1} parent=1 // pred_fallthru
      _
    // Predicated region
    $region45: #{tpu_custom_call.1} parent=1 // pred_check
      _
    $region46: #{tpu_custom_call.1} parent=1 // pred_check_branch
      %554 = sbr.rel (0) target = $region48
    $region47: #{tpu_custom_call.1} parent=1 // pred_region
      %555 = dma.done [#allocation5], 512
    $region48: #{tpu_custom_call.1} parent=1 // pred_fallthru
      _
    %556 = vsyncpa [#allocation4], 1
    %557 = vsyncpa [#allocation7], 1
    %558 = vsyncpa [#allocation5], 1

</llo_original>
